<compile_context>
chip_gen: v7x
topology: tpu7x:2x2x1
jax: 0.10.0
libtpu: 0.0.40
codegen_flags: <defaults>
</compile_context>

<pallas_src>
import functools
import math

import jax
import jax.numpy as jnp
from jax.experimental import pallas as pl
from jax.experimental.pallas import tpu as pltpu


def _round_up(n, m):
    return ((n + m - 1) // m) * m


# --------------------------------------------------------------------------- kernel ----
def attention_kernel(x_ref, kq_ref, wv_t_ref, w1_t_ref, b1_ref, w2_t_ref, b2_ref, o_ref):
    # x may be streamed as bf16 (halves HBM traffic); all arithmetic is done in f32.
    x = x_ref[...].astype(jnp.float32)   # (TB, S, D)
    kq = kq_ref[...]                     # (1, D)   = (q @ Wk) / sqrt(D)
    wv_t = wv_t_ref[...]                 # (D, D)   (in, out) layout
    w1_t = w1_t_ref[...]                 # (D, HP)  (in, out), zero-padded to HP
    b1 = b1_ref[...]                     # (1, HP)
    w2_t = w2_t_ref[...]                 # (HP, CP) zero-padded
    b2 = b2_ref[...]                     # (1, CP)

    # scores[b, s] = x[b, s, :] . kq   (1/sqrt(D) already folded into kq)
    # TODO(synk): on v7x, offload this D-reduction to the idle MXU (reshape to (TB*S, D)
    # and dot against a (D, 128) matrix holding kq in column 0) if the VPU/XLU slots
    # become co-critical with the 3.2 TB/s DMA stream; on v5e/v6e the VPU has slack.
    scores = jnp.sum(x * kq[None, :, :], axis=-1)                       # (TB, S)

    # Numerically stable softmax over S; normalize on the pooled (TB, D) result.
    m = jnp.max(scores, axis=1, keepdims=True)                          # (TB, 1)
    p = jnp.exp(scores - m)                                             # (TB, S)
    inv_l = 1.0 / jnp.sum(p, axis=1, keepdims=True)                     # exact; (TB,1) so free

    # pooled[b, :] = sum_s p[b, s] * x[b, s, :]
    pooled = jnp.sum(x * p[:, :, None], axis=1) * inv_l                 # (TB, D)

    # context = pooled @ Wv^T  (one small MXU matmul instead of a (B,S,D)x(D,D) one)
    ctx = jnp.dot(pooled, wv_t, preferred_element_type=jnp.float32)     # (TB, D)

    # MLP head: linear1 -> linear2 (no activation, matching the reference module).
    h = jnp.dot(ctx, w1_t, preferred_element_type=jnp.float32) + b1     # (TB, HP)
    out = jnp.dot(h, w2_t, preferred_element_type=jnp.float32) + b2     # (TB, CP)

    o_ref[...] = out.astype(o_ref.dtype)

    # TODO(synk): for very long S, add a second "arbitrary" grid axis over S with an
    # online-softmax accumulator (flash-attention style) so the working set stays O(TB*D).


# ------------------------------------------------------------------- wrapper helpers ----
def _resident(shape):
    """BlockSpec for a small array kept VMEM-resident (constant index_map, 1 buffer)."""
    return pl.BlockSpec(shape, lambda i: (0,) * len(shape), pipeline_mode=pl.Buffered(1))


def _vmem_capacity_bytes():
    cap = 64 * 1024 * 1024  # conservative default = v7x per-TensorCore VMEM
    try:
        info = pltpu.get_tpu_info()
        cap = int(getattr(info, "vmem_capacity_bytes", cap))
    except Exception:
        pass
    return cap


def _choose_block_b(B, S, D, CP, weight_bytes, x_itemsize, x_buffers, vmem_budget):
    """Largest batch tile that fits the VMEM budget (8-multiple, preferring a divisor of B)."""
    Sp = _round_up(S, 8)     # sublane padding
    Dp = _round_up(D, 128)   # lane padding  (D=32 still occupies 128 lanes per vreg)
    # Per batch-row footprint of one grid step:
    #   x pipeline buffers in the streaming dtype + ~3 f32 working copies (upcast and the
    #   broadcast-multiply temporaries of the scores/pooled reductions) + the
    #   double-buffered output tile.
    per_row = x_buffers * Sp * Dp * x_itemsize + 3 * Sp * Dp * 4 + 2 * CP * 4
    avail = max(vmem_budget - weight_bytes - (2 << 20), per_row)  # 2 MiB compiler headroom
    bb = max(int(avail // per_row), 1)

    # Keep >= 2 grid steps when the batch allows it (v7x has 2 TensorCores per chip).
    if B >= 16:
        bb = min(bb, B // 2)

    if bb >= B:
        return B
    bb = max((bb // 8) * 8, 8)
    cand = bb
    while cand > 8 and B % cand != 0:   # prefer no ragged last tile (wasted DMA / OOB reads)
        cand -= 8
    return cand if B % cand == 0 else bb


# ------------------------------------------------------------------------- forward ----
@functools.partial(jax.jit, static_argnames=("block_b", "stream_dtype", "x_buffer_count"))
def attention_module_forward(x, params, *, block_b=None, stream_dtype=None, x_buffer_count=2):
    """x: (B, S, D). params: dict of weights in nn.Linear (out, in) layout."""
    B, S, D = x.shape
    H = params["w1"].shape[0]
    C = params["w2"].shape[0]

    # Lane-dense padding for the tiny MLP head (avoids masked partial stores).
    HP = _round_up(H, 128)
    CP = _round_up(C, 128)

    # Optionally stream x in a narrower dtype (e.g. bf16) — the kernel upcasts to f32.
    if stream_dtype is not None:
        x = x.astype(stream_dtype)
    x_itemsize = int(jnp.dtype(x.dtype).itemsize)

    # Fold the query vector and the 1/sqrt(D) scale into Wk (tiny one-time XLA op).
    kq = (params["q"].astype(jnp.float32) @ params["wk"].astype(jnp.float32)) * (1.0 / math.sqrt(D))
    kq = kq.reshape(1, D)

    # Pre-transpose weights to (in, out); zero-pad the head dims to lane width.
    wv_t = params["wv"].T.astype(jnp.float32)                                          # (D, D)
    w1_t = jnp.zeros((D, HP), jnp.float32).at[:, :H].set(params["w1"].T.astype(jnp.float32))
    b1p = jnp.zeros((1, HP), jnp.float32).at[0, :H].set(params["b1"].astype(jnp.float32))
    w2_t = jnp.zeros((HP, CP), jnp.float32).at[:H, :C].set(params["w2"].T.astype(jnp.float32))
    b2p = jnp.zeros((1, CP), jnp.float32).at[0, :C].set(params["b2"].astype(jnp.float32))

    # VMEM footprint of the single-buffered resident weights (with (8,128) layout padding).
    def _padded_bytes(r, c):
        return _round_up(r, 8) * _round_up(c, 128) * 4
    weight_bytes = (_padded_bytes(1, D) + _padded_bytes(D, D) + _padded_bytes(D, HP)
                    + _padded_bytes(1, HP) + _padded_bytes(HP, CP) + _padded_bytes(1, CP))

    # VMEM budget: ~75% of detected per-core capacity (≈96 MiB on v5e/v6e, ≈48 MiB on v7x).
    vmem_budget = min((_vmem_capacity_bytes() * 3) // 4, 100 * 1024 * 1024)

    if block_b is None:
        block_b = _choose_block_b(B, S, D, CP, weight_bytes, x_itemsize, x_buffer_count,
                                  vmem_budget)
    else:
        # Validate/clamp user-provided tile: multiple of 8 or full-extent B.
        block_b = min(int(block_b), B)
        if block_b != B and block_b % 8 != 0:
            block_b = max((block_b // 8) * 8, 8)
            if block_b > B:
                block_b = B

    grid = (pl.cdiv(B, block_b),)

    # Only x and the output are pipelined over the batch grid; a deeper x buffer can be
    # requested on v7x if the smaller tile exposes DMA latency.
    x_spec_kwargs = {}
    if x_buffer_count != 2:
        x_spec_kwargs["pipeline_mode"] = pl.Buffered(x_buffer_count)
    x_spec = pl.BlockSpec((block_b, S, D), lambda i: (i, 0, 0), **x_spec_kwargs)

    # Advisory cost estimate so XLA schedules the weight prep / downstream ops well.
    flops = 4 * B * S * D + 2 * B * (D * D + D * HP + HP * CP)
    bytes_accessed = B * S * D * x_itemsize + B * CP * 4 + weight_bytes
    cost = pl.CostEstimate(flops=flops, transcendentals=B * S, bytes_accessed=bytes_accessed)

    out = pl.pallas_call(
        attention_kernel,
        out_shape=jax.ShapeDtypeStruct((B, CP), jnp.float32),
        grid=grid,
        in_specs=[
            x_spec,                   # x: pipelined over batch
            _resident((1, D)),        # kq
            _resident((D, D)),        # Wv^T
            _resident((D, HP)),       # W1^T (padded)
            _resident((1, HP)),       # b1   (padded)
            _resident((HP, CP)),      # W2^T (padded)
            _resident((1, CP)),       # b2   (padded)
        ],
        out_specs=pl.BlockSpec((block_b, CP), lambda i: (i, 0)),
        compiler_params=pltpu.CompilerParams(
            dimension_semantics=("parallel",),   # shard the batch grid across TensorCores
            vmem_limit_bytes=int(vmem_budget),
        ),
        cost_estimate=cost,
    )(x, kq, wv_t, w1_t, b1p, w2_t, b2p)

    return out[:, :C]


# ----------------------------------------------------------------------- reference ----
def attention_module_reference(x, params):
    """Pure-JAX reference mirroring the PyTorch forward exactly."""
    D = x.shape[-1]
    key = jnp.einsum("bsd,ed->bse", x, params["wk"])
    val = jnp.einsum("bsd,ed->bse", x, params["wv"])
    scores = jnp.einsum("d,bsd->bs", params["q"], key) / jnp.sqrt(jnp.float32(D))
    attn = jax.nn.softmax(scores, axis=1)
    ctx = jnp.sum(val * attn[:, :, None], axis=1)
    h = ctx @ params["w1"].T + params["b1"]
    return h @ params["w2"].T + params["b2"]


def init_params(key, input_dim, hidden_dim, num_classes):
    ks = jax.random.split(key, 7)

    def unif(k, shape, bound):
        return jax.random.uniform(k, shape, jnp.float32, -bound, bound)

    return {
        "q": jax.random.uniform(ks[0], (input_dim,), jnp.float32),            # torch.rand -> [0,1)
        "wk": unif(ks[1], (input_dim, input_dim), 1.0 / math.sqrt(input_dim)),
        "wv": unif(ks[2], (input_dim, input_dim), 1.0 / math.sqrt(input_dim)),
        "w1": unif(ks[3], (hidden_dim, input_dim), 1.0 / math.sqrt(input_dim)),
        "b1": unif(ks[4], (hidden_dim,), 1.0 / math.sqrt(input_dim)),
        "w2": unif(ks[5], (num_classes, hidden_dim), 1.0 / math.sqrt(hidden_dim)),
        "b2": unif(ks[6], (num_classes,), 1.0 / math.sqrt(hidden_dim)),
    }


if __name__ == "__main__":
    B, S, D, H, C = 2, 8, 32, 16, 4   # batch, seq, input_dim, hidden_dim, num_classes

    root = jax.random.PRNGKey(0)
    kx, kp = jax.random.split(root)
    x = jax.random.normal(kx, (B, S, D), jnp.float32)
    params = init_params(kp, D, H, C)

    ref = attention_module_reference(x, params)

    # f32 path (exact softmax normalization -> tight tolerance)
    out = attention_module_forward(x, params)
    out = jax.block_until_ready(out)
    assert out.shape == (B, C), out.shape
    assert jnp.allclose(out, ref, atol=1e-4, rtol=1e-4), (out, ref)

    # bf16-streaming path (halves HBM bytes for the mem-bound x read; math stays f32)
    out_bf16 = attention_module_forward(x, params, stream_dtype=jnp.bfloat16)
    out_bf16 = jax.block_until_ready(out_bf16)
    assert jnp.allclose(out_bf16, ref, atol=5e-2, rtol=5e-2), (out_bf16, ref)

    print("KERNEL_OK")
</pallas_src>

<mosaic_0001>
module attributes {stable_mosaic.version = 11 : i64} {
  func.func @attention_kernel(%arg0: i32, %arg1: memref<2x8x32xf32, #tpu.memory_space<vmem>>, %arg2: memref<1x32xf32, #tpu.memory_space<vmem>>, %arg3: memref<32x32xf32, #tpu.memory_space<vmem>>, %arg4: memref<32x128xf32, #tpu.memory_space<vmem>>, %arg5: memref<1x128xf32, #tpu.memory_space<vmem>>, %arg6: memref<128x128xf32, #tpu.memory_space<vmem>>, %arg7: memref<1x128xf32, #tpu.memory_space<vmem>>, %arg8: memref<2x128xf32, #tpu.memory_space<vmem>>) attributes {dimension_semantics = [#tpu.dimension_semantics<parallel>], iteration_bounds = array<i64: 1>, scalar_prefetch = 0 : i64, scratch_operands = 0 : i64, tpu.core_type = #tpu.core_type<tc>, window_params = [{transform_indices = @transform_0, window_bounds = array<i64: 2, 8, 32>}, {pipeline_mode = #tpu.pipeline_mode<synchronous>, transform_indices = @transform_1, window_bounds = array<i64: 1, 32>}, {pipeline_mode = #tpu.pipeline_mode<synchronous>, transform_indices = @transform_2, window_bounds = array<i64: 32, 32>}, {pipeline_mode = #tpu.pipeline_mode<synchronous>, transform_indices = @transform_3, window_bounds = array<i64: 32, 128>}, {pipeline_mode = #tpu.pipeline_mode<synchronous>, transform_indices = @transform_4, window_bounds = array<i64: 1, 128>}, {pipeline_mode = #tpu.pipeline_mode<synchronous>, transform_indices = @transform_5, window_bounds = array<i64: 128, 128>}, {pipeline_mode = #tpu.pipeline_mode<synchronous>, transform_indices = @transform_6, window_bounds = array<i64: 1, 128>}, {transform_indices = @transform_7, window_bounds = array<i64: 2, 128>}]} {
    %c0 = arith.constant 0 : index
    %c0_0 = arith.constant 0 : index
    %c0_1 = arith.constant 0 : index
    %0 = vector.load %arg1[%c0, %c0_0, %c0_1] : memref<2x8x32xf32, #tpu.memory_space<vmem>>, vector<2x8x32xf32>
    %c0_2 = arith.constant 0 : index
    %c0_3 = arith.constant 0 : index
    %1 = vector.load %arg2[%c0_2, %c0_3] : memref<1x32xf32, #tpu.memory_space<vmem>>, vector<1x32xf32>
    %c0_4 = arith.constant 0 : index
    %c0_5 = arith.constant 0 : index
    %2 = vector.load %arg3[%c0_4, %c0_5] : memref<32x32xf32, #tpu.memory_space<vmem>>, vector<32x32xf32>
    %c0_6 = arith.constant 0 : index
    %c0_7 = arith.constant 0 : index
    %3 = vector.load %arg4[%c0_6, %c0_7] : memref<32x128xf32, #tpu.memory_space<vmem>>, vector<32x128xf32>
    %c0_8 = arith.constant 0 : index
    %c0_9 = arith.constant 0 : index
    %4 = vector.load %arg5[%c0_8, %c0_9] : memref<1x128xf32, #tpu.memory_space<vmem>>, vector<1x128xf32>
    %c0_10 = arith.constant 0 : index
    %c0_11 = arith.constant 0 : index
    %5 = vector.load %arg6[%c0_10, %c0_11] : memref<128x128xf32, #tpu.memory_space<vmem>>, vector<128x128xf32>
    %c0_12 = arith.constant 0 : index
    %c0_13 = arith.constant 0 : index
    %6 = vector.load %arg7[%c0_12, %c0_13] : memref<1x128xf32, #tpu.memory_space<vmem>>, vector<1x128xf32>
    %7 = vector.shape_cast %1 : vector<1x32xf32> to vector<1x1x32xf32>
    %8 = vector.broadcast %7 : vector<1x1x32xf32> to vector<2x8x32xf32>
    %9 = arith.mulf %0, %8 : vector<2x8x32xf32>
    %cst = arith.constant dense<0.000000e+00> : vector<2x8xf32>
    %10 = vector.multi_reduction <add>, %9, %cst [2] : vector<2x8x32xf32> to vector<2x8xf32>
    %cst_14 = arith.constant dense<0xFF800000> : vector<2xf32>
    %11 = vector.multi_reduction <maximumf>, %10, %cst_14 [1] : vector<2x8xf32> to vector<2xf32>
    %12 = vector.shape_cast %11 : vector<2xf32> to vector<2x1xf32>
    %13 = vector.broadcast %12 : vector<2x1xf32> to vector<2x8xf32>
    %14 = arith.subf %10, %13 : vector<2x8xf32>
    %15 = math.exp %14 : vector<2x8xf32>
    %cst_15 = arith.constant dense<0.000000e+00> : vector<2xf32>
    %16 = vector.multi_reduction <add>, %15, %cst_15 [1] : vector<2x8xf32> to vector<2xf32>
    %17 = vector.shape_cast %16 : vector<2xf32> to vector<2x1xf32>
    %cst_16 = arith.constant 1.000000e+00 : f32
    %18 = vector.broadcast %cst_16 : f32 to vector<2x1xf32>
    %19 = arith.divf %18, %17 : vector<2x1xf32>
    %20 = vector.shape_cast %15 : vector<2x8xf32> to vector<2x8x1xf32>
    %21 = vector.broadcast %20 : vector<2x8x1xf32> to vector<2x8x32xf32>
    %22 = arith.mulf %0, %21 : vector<2x8x32xf32>
    %cst_17 = arith.constant dense<0.000000e+00> : vector<2x32xf32>
    %23 = vector.multi_reduction <add>, %22, %cst_17 [1] : vector<2x8x32xf32> to vector<2x32xf32>
    %24 = vector.broadcast %19 : vector<2x1xf32> to vector<2x32xf32>
    %25 = arith.mulf %23, %24 : vector<2x32xf32>
    %cst_18 = arith.constant dense<0.000000e+00> : vector<2x32xf32>
    %26 = tpu.matmul %25, %2, %cst_18 {dimension_numbers = #tpu.dot_dimension_numbers<[1], [0], [0], [1], [0, 0, 1, 1], [], []>} : vector<2x32xf32>, vector<32x32xf32>, vector<2x32xf32> -> vector<2x32xf32>
    %cst_19 = arith.constant dense<0.000000e+00> : vector<2x128xf32>
    %27 = tpu.matmul %26, %3, %cst_19 {dimension_numbers = #tpu.dot_dimension_numbers<[1], [0], [0], [1], [0, 0, 1, 1], [], []>} : vector<2x32xf32>, vector<32x128xf32>, vector<2x128xf32> -> vector<2x128xf32>
    %28 = vector.broadcast %4 : vector<1x128xf32> to vector<2x128xf32>
    %29 = arith.addf %27, %28 : vector<2x128xf32>
    %cst_20 = arith.constant dense<0.000000e+00> : vector<2x128xf32>
    %30 = tpu.matmul %29, %5, %cst_20 {dimension_numbers = #tpu.dot_dimension_numbers<[1], [0], [0], [1], [0, 0, 1, 1], [], []>} : vector<2x128xf32>, vector<128x128xf32>, vector<2x128xf32> -> vector<2x128xf32>
    %31 = vector.broadcast %6 : vector<1x128xf32> to vector<2x128xf32>
    %32 = arith.addf %30, %31 : vector<2x128xf32>
    %c0_21 = arith.constant 0 : index
    %c0_22 = arith.constant 0 : index
    %33 = vector.load %arg8[%c0_21, %c0_22] : memref<2x128xf32, #tpu.memory_space<vmem>>, vector<2x128xf32>
    tpu.vector_store %arg8[%c0_21, %c0_22], %32 {strides = array<i32>} : memref<2x128xf32, #tpu.memory_space<vmem>>, vector<2x128xf32>,
    return
  }
  func.func @transform_0(%arg0: i32) -> (i32, i32, i32) {
    %c0_i32 = arith.constant 0 : i32
    %c0_i32_0 = arith.constant 0 : i32
    %c0_i32_1 = arith.constant 0 : i32
    return %arg0, %c0_i32, %c0_i32_0 : i32, i32, i32
  }
  func.func @transform_1(%arg0: i32) -> (i32, i32) {
    %c0_i32 = arith.constant 0 : i32
    %c0_i32_0 = arith.constant 0 : i32
    %c0_i32_1 = arith.constant 0 : i32
    return %c0_i32, %c0_i32_0 : i32, i32
  }
  func.func @transform_2(%arg0: i32) -> (i32, i32) {
    %c0_i32 = arith.constant 0 : i32
    %c0_i32_0 = arith.constant 0 : i32
    %c0_i32_1 = arith.constant 0 : i32
    return %c0_i32, %c0_i32_0 : i32, i32
  }
  func.func @transform_3(%arg0: i32) -> (i32, i32) {
    %c0_i32 = arith.constant 0 : i32
    %c0_i32_0 = arith.constant 0 : i32
    %c0_i32_1 = arith.constant 0 : i32
    return %c0_i32, %c0_i32_0 : i32, i32
  }
  func.func @transform_4(%arg0: i32) -> (i32, i32) {
    %c0_i32 = arith.constant 0 : i32
    %c0_i32_0 = arith.constant 0 : i32
    %c0_i32_1 = arith.constant 0 : i32
    return %c0_i32, %c0_i32_0 : i32, i32
  }
  func.func @transform_5(%arg0: i32) -> (i32, i32) {
    %c0_i32 = arith.constant 0 : i32
    %c0_i32_0 = arith.constant 0 : i32
    %c0_i32_1 = arith.constant 0 : i32
    return %c0_i32, %c0_i32_0 : i32, i32
  }
  func.func @transform_6(%arg0: i32) -> (i32, i32) {
    %c0_i32 = arith.constant 0 : i32
    %c0_i32_0 = arith.constant 0 : i32
    %c0_i32_1 = arith.constant 0 : i32
    return %c0_i32, %c0_i32_0 : i32, i32
  }
  func.func @transform_7(%arg0: i32) -> (i32, i32) {
    %c0_i32 = arith.constant 0 : i32
    %c0_i32_0 = arith.constant 0 : i32
    return %arg0, %c0_i32 : i32, i32
  }
}

</mosaic_0001>

<llo_original>
// kernel: attention_module_forward.1
$region0: #{attention_module_forward.1}
  #allocation0 [shape = 'u32[]', space=smem, size = 0x4, offset = 0x4, fixed_abs, tag = 'smem constant byte address 0x4 - core index']
  #allocation1 [shape = 'u32[144,128]{1,0:T(1,128)}', space=vmem, size = 0x12000, scoped, tag = 'internal scratch']
  %s0 = inlined_call_operand.vmem [shape: f32[2,8,32], index: 0, kind: input, shape index: {}]
  %s1 = inlined_call_operand.vmem [shape: f32[1,32], index: 1, kind: input, shape index: {}]
  %s2 = inlined_call_operand.vmem [shape: f32[32,32], index: 2, kind: input, shape index: {}]
  %s3 = inlined_call_operand.vmem [shape: f32[32,128], index: 3, kind: input, shape index: {}]
  %s4 = inlined_call_operand.vmem [shape: f32[1,128], index: 4, kind: input, shape index: {}]
  %s5 = inlined_call_operand.vmem [shape: f32[128,128], index: 5, kind: input, shape index: {}]
  %s6 = inlined_call_operand.vmem [shape: f32[1,128], index: 6, kind: input, shape index: {}]
  %s7 = inlined_call_operand.hbm [shape: f32[2,128], index: 7, kind: output, shape index: {}]
  %s8 = sld [smem:[#allocation0]]
  $region38: #{attention_module_forward.1} parent=0
    _
  %s10 = ssub.s32 1, %s8
  %s11 = scalar_select 0, %s10, %s8
  $region1: #{attention_module_forward.1} parent=0
    #allocation2 [shape = 'u8[1024]{0}', space=vmem, size = 0x400, scoped, tag = 'output window, operand 0, single buffered']
    #allocation3 [shape = 's32[1]{0}', space=sflag, size = 0x4, scoped, tag = 'scoped memory for attention_module_forward.1']
    %12 = vsyncpa [#allocation3], 0
    // Predicated region
    $region2: #{attention_module_forward.1} parent=1 // pred_check
      _
    $region3: #{attention_module_forward.1} parent=1 // pred_check_branch
      %14 = sbr.rel (0) target = $region5
    $region4: #{attention_module_forward.1} parent=1 // pred_region
      _
    $region5: #{attention_module_forward.1} parent=1 // pred_fallthru
      _
    // Predicated region
    $region6: #{attention_module_forward.1} parent=1 // pred_check
      _
    $region7: #{attention_module_forward.1} parent=1 // pred_check_branch
      %16 = sbr.rel (0) target = $region9
    $region8: #{attention_module_forward.1} parent=1 // pred_region
      _
    $region9: #{attention_module_forward.1} parent=1 // pred_fallthru
      _
    // Predicated region
    $region10: #{attention_module_forward.1} parent=1 // pred_check
      _
    $region11: #{attention_module_forward.1} parent=1 // pred_check_branch
      %18 = sbr.rel (0) target = $region13
    $region12: #{attention_module_forward.1} parent=1 // pred_region
      _
    $region13: #{attention_module_forward.1} parent=1 // pred_fallthru
      _
    // Predicated region
    $region14: #{attention_module_forward.1} parent=1 // pred_check
      _
    $region15: #{attention_module_forward.1} parent=1 // pred_check_branch
      %20 = sbr.rel (0) target = $region17
    $region16: #{attention_module_forward.1} parent=1 // pred_region
      _
    $region17: #{attention_module_forward.1} parent=1 // pred_fallthru
      _
    // Predicated region
    $region18: #{attention_module_forward.1} parent=1 // pred_check
      _
    $region19: #{attention_module_forward.1} parent=1 // pred_check_branch
      %22 = sbr.rel (0) target = $region21
    $region20: #{attention_module_forward.1} parent=1 // pred_region
      _
    $region21: #{attention_module_forward.1} parent=1 // pred_fallthru
      _
    // Predicated region
    $region22: #{attention_module_forward.1} parent=1 // pred_check
      _
    $region23: #{attention_module_forward.1} parent=1 // pred_check_branch
      %24 = sbr.rel (0) target = $region25
    $region24: #{attention_module_forward.1} parent=1 // pred_region
      _
    $region25: #{attention_module_forward.1} parent=1 // pred_fallthru
      _
    // Predicated region
    $region26: #{attention_module_forward.1} parent=1 // pred_check
      _
    $region27: #{attention_module_forward.1} parent=1 // pred_check_branch
      %26 = sbr.rel (0) target = $region29
    $region28: #{attention_module_forward.1} parent=1 // pred_region
      _
    $region29: #{attention_module_forward.1} parent=1 // pred_fallthru
      _
    %v27 = vld [vmem:[%s0] sm:$0xff]
    %v28 = vld [vmem:[%s0 + $0x8] sm:$0xff]
    %v29 = vld [vmem:[%s1] sm:$0x1]
    %v30 = vld [vmem:[%s2] sm:$0xff]
    %v31 = vld [vmem:[%s2 + $0x8] sm:$0xff]
    %v32 = vld [vmem:[%s2 + $0x10] sm:$0xff]
    %v33 = vld [vmem:[%s2 + $0x18] sm:$0xff]
    %v34 = vld [vmem:[%s3] sm:$0xff]
    %v35 = vld [vmem:[%s3 + $0x8] sm:$0xff]
    %v36 = vld [vmem:[%s3 + $0x10] sm:$0xff]
    %v37 = vld [vmem:[%s3 + $0x18] sm:$0xff]
    %v38 = vld [vmem:[%s4] sm:$0x1]
    %v39 = vld [vmem:[%s5] sm:$0xff]
    %v40 = vld [vmem:[%s5 + $0x8] sm:$0xff]
    %v41 = vld [vmem:[%s5 + $0x10] sm:$0xff]
    %v42 = vld [vmem:[%s5 + $0x18] sm:$0xff]
    %v43 = vld [vmem:[%s5 + $0x20] sm:$0xff]
    %v44 = vld [vmem:[%s5 + $0x28] sm:$0xff]
    %v45 = vld [vmem:[%s5 + $0x30] sm:$0xff]
    %v46 = vld [vmem:[%s5 + $0x38] sm:$0xff]
    %v47 = vld [vmem:[%s5 + $0x40] sm:$0xff]
    %v48 = vld [vmem:[%s5 + $0x48] sm:$0xff]
    %v49 = vld [vmem:[%s5 + $0x50] sm:$0xff]
    %v50 = vld [vmem:[%s5 + $0x58] sm:$0xff]
    %v51 = vld [vmem:[%s5 + $0x60] sm:$0xff]
    %v52 = vld [vmem:[%s5 + $0x68] sm:$0xff]
    %v53 = vld [vmem:[%s5 + $0x70] sm:$0xff]
    %v54 = vld [vmem:[%s5 + $0x78] sm:$0xff]
    %v55 = vld [vmem:[%s6] sm:$0x1]
    %v57 = vlaneseq
    %v58 = vshrl.u32 %v57, 7
    %v59 = vsub.s32 0, %v58
    %v60 = vrot.slane %v29, %v59
    %v62 = vmul.f32 %v27, %v60
    %v63 = vmul.f32 %v28, %v60
    %vm64 = vcmask 261120
    %v65 = vsel %vm64, %v62, 0.0
    %66 = vadd.xlane.f32.xlu0 %v65
    %v67 = vpop.xlane.xlu0 %66
    %v68 = vsel %vm64, %v63, 0.0
    %69 = vadd.xlane.f32.xlu0 %v68
    %v70 = vpop.xlane.xlu0 %69
    %v73 = vlaneseq
    %v74 = vand.u32 %v73, 127
    %v75 = vlaneseq
    %v76 = vshrl.u32 %v75, 7
    %v77 = vsub.s32 %v74, %v76
    %v78 = vrot.slane %v67, %v77
    %v79 = vlaneseq
    %v80 = vshrl.u32 %v79, 7
    %v81 = vsub.s32 %v74, %v80
    %v82 = vrot.slane %v70, %v81
    %vm83 = vcmask 1041409
    %v84 = vsel %vm83, %v82, %v78
    %vm86 = vcmask 58368
    %v87 = vsel %vm86, %v84, -inf
    %88 = vmax.xlane.f32.xlu0 %v87
    %v89 = vpop.xlane.xlu0 %88
    %v91 = vlaneseq
    %v92 = vshrl.u32 %v91, 7
    %v93 = vsub.s32 0, %v92
    %v94 = vrot.slane %v89, %v93
    %v95 = vlaneseq
    %v96 = vshrl.u32 %v95, 7
    %v97 = vsub.s32 1, %v96
    %v98 = vrot.slane %v89, %v97
    %v101 = vsub.f32 %v67, %v94
    %v102 = vsub.f32 %v70, %v98
    %v103 = vmul.f32 %v101, 1.442695
    %v104 = vpow.pop %v103
    %v105 = vmul.f32 %v102, 1.442695
    %v106 = vpow.pop %v105
    %109 = vset.pattern.permute.xlu0 0
    %110 = vperm.xlu0 %109, %v104
    %v111 = vpop.permute.xlu0 %110
    %112 = vset.pattern.permute.xlu0 0
    %113 = vperm.xlu0 %112, %v106
    %v114 = vpop.permute.xlu0 %113
    %v115 = vlaneseq
    %v116 = vshrl.u32 %v115, 7
    %v117 = vsub.s32 %v74, %v116
    %v118 = vrot.slane %v111, %v117
    %v119 = vlaneseq
    %v120 = vshrl.u32 %v119, 7
    %v121 = vsub.s32 %v74, %v120
    %v122 = vrot.slane %v114, %v121
    %v123 = vsel %vm83, %v122, %v118
    %v125 = vsel %vm86, %v123, 0.0
    %126 = vadd.xlane.f32.xlu0 %v125
    %v127 = vpop.xlane.xlu0 %126
    %v128 = vrcp.pop %v127
    %v129 = vmul.f32 1.0, %v128
    %v132 = vmul.f32 %v27, %v111
    %v133 = vmul.f32 %v28, %v114
    %v134 = vsel %vm64, %v132, 0.0
    %v135 = vrot.slane %v134, 4
    %v136 = vadd.f32 %v134, %v135
    %v137 = vrot.slane %v136, 2
    %v138 = vadd.f32 %v136, %v137
    %v139 = vrot.slane %v138, 1
    %v140 = vadd.f32 %v138, %v139
    %v141 = vsel %vm64, %v133, 0.0
    %v142 = vrot.slane %v141, 4
    %v143 = vadd.f32 %v141, %v142
    %v144 = vrot.slane %v143, 2
    %v145 = vadd.f32 %v143, %v144
    %v146 = vrot.slane %v145, 1
    %v147 = vadd.f32 %v145, %v146
    %v149 = vrot.slane %v129, 1
    %v152 = vmul.f32 %v140, %v129
    %v153 = vmul.f32 %v147, %v149
    %v156 = vrot.slane %v153, 7
    %v157 = vsel %vm83, %v156, %v152
    %v158 = vsel %vm64, %v157, 0
    %160 = vmatprep.subr.mxu0 0.0
    %161 = vmatpush1.msra.mxu0 %v30
    %162 = vmatprep.subr.mxu0 0.0
    %163 = vmatpush1.msra.mxu0 %v31
    %164 = vmatprep.subr.mxu0 0.0
    %165 = vmatpush1.msra.mxu0 %v32
    %166 = vmatprep.subr.mxu0 0.0
    %167 = vmatpush1.msra.mxu0 %v33
    %168 = vmatprep.subr.mxu0 0.0
    %169 = vmatpush1.msra.mxu0 0.0
    %170 = vmatprep.subr.mxu0 0.0
    %171 = vmatpush1.msra.mxu0 0.0
    %172 = vmatprep.subr.mxu0 0.0
    %173 = vmatpush1.msra.mxu0 0.0
    %174 = vmatprep.subr.mxu0 0.0
    %175 = vmatpush1.msra.mxu0 0.0
    %176 = vmatprep.subr.mxu0 0.0
    %177 = vmatpush1.msra.mxu0 0.0
    %178 = vmatprep.subr.mxu0 0.0
    %179 = vmatpush1.msra.mxu0 0.0
    %180 = vmatprep.subr.mxu0 0.0
    %181 = vmatpush1.msra.mxu0 0.0
    %182 = vmatprep.subr.mxu0 0.0
    %183 = vmatpush1.msra.mxu0 0.0
    %184 = vmatprep.subr.mxu0 0.0
    %185 = vmatpush1.msra.mxu0 0.0
    %186 = vmatprep.subr.mxu0 0.0
    %187 = vmatpush1.msra.mxu0 0.0
    %188 = vmatprep.subr.mxu0 0.0
    %189 = vmatpush1.msra.mxu0 0.0
    %190 = vmatprep.subr.mxu0 0.0
    %191 = vmatpush1.msra.mxu0 0.0
    %192 = vmatprep.subr.mxu0 0.0
    %193 = vmatpush1.msra.mxu0 0.0
    %194 = vmatprep.subr.mxu0 0.0
    %195 = vmatpush1.msra.mxu0 0.0
    %196 = vmatprep.subr.mxu0 0.0
    %197 = vmatpush1.msra.mxu0 0.0
    %198 = vmatprep.subr.mxu0 0.0
    %199 = vmatpush1.msra.mxu0 0.0
    %200 = vmatprep.subr.mxu0 0.0
    %201 = vmatpush1.msra.mxu0 0.0
    %202 = vmatprep.subr.mxu0 0.0
    %203 = vmatpush1.msra.mxu0 0.0
    %204 = vmatprep.subr.mxu0 0.0
    %205 = vmatpush1.msra.mxu0 0.0
    %206 = vmatprep.subr.mxu0 0.0
    %207 = vmatpush1.msra.mxu0 0.0
    %208 = vmatprep.subr.mxu0 0.0
    %209 = vmatpush1.msra.mxu0 0.0
    %210 = vmatprep.subr.mxu0 0.0
    %211 = vmatpush1.msra.mxu0 0.0
    %212 = vmatprep.subr.mxu0 0.0
    %213 = vmatpush1.msra.mxu0 0.0
    %214 = vmatprep.subr.mxu0 0.0
    %215 = vmatpush1.msra.mxu0 0.0
    %216 = vmatprep.subr.mxu0 0.0
    %217 = vmatpush1.msra.mxu0 0.0
    %218 = vmatprep.subr.mxu0 0.0
    %219 = vmatpush1.msra.mxu0 0.0
    %220 = vmatprep.subr.mxu0 0.0
    %221 = vmatpush1.msra.mxu0 0.0
    %222 = vmatprep.subr.mxu0 0.0
    %223 = vmatpush1.msra.mxu0 0.0
    %224 = vmatprep.mubr.f32.mxu0 0.0
    %225 = vmatmul.mubr.f32.gmra.mrb[0].mxu0 %v158
    %v226 = vpop.f32.mrb[0].mxu0
    %v227 = vadd.f32 0.0, %v226
    %v228 = vpop.f32.mrb[0].mxu0
    %229 = vdwg.mxu0
    %v231 = vlaneseq
    %v232 = vshrl.u32 %v231, 7
    %v233 = vsub.s32 0, %v232
    %v234 = vrot.slane %v38, %v233
    %v237 = vsel %vm64, %v227, 0
    %239 = vmatprep.subr.mxu0 0.0
    %240 = vmatpush1.msra.mxu0 %v34
    %241 = vmatprep.subr.mxu0 0.0
    %242 = vmatpush1.msra.mxu0 %v35
    %243 = vmatprep.subr.mxu0 0.0
    %244 = vmatpush1.msra.mxu0 %v36
    %245 = vmatprep.subr.mxu0 0.0
    %246 = vmatpush1.msra.mxu0 %v37
    %247 = vmatprep.subr.mxu0 0.0
    %248 = vmatpush1.msra.mxu0 0.0
    %249 = vmatprep.subr.mxu0 0.0
    %250 = vmatpush1.msra.mxu0 0.0
    %251 = vmatprep.subr.mxu0 0.0
    %252 = vmatpush1.msra.mxu0 0.0
    %253 = vmatprep.subr.mxu0 0.0
    %254 = vmatpush1.msra.mxu0 0.0
    %255 = vmatprep.subr.mxu0 0.0
    %256 = vmatpush1.msra.mxu0 0.0
    %257 = vmatprep.subr.mxu0 0.0
    %258 = vmatpush1.msra.mxu0 0.0
    %259 = vmatprep.subr.mxu0 0.0
    %260 = vmatpush1.msra.mxu0 0.0
    %261 = vmatprep.subr.mxu0 0.0
    %262 = vmatpush1.msra.mxu0 0.0
    %263 = vmatprep.subr.mxu0 0.0
    %264 = vmatpush1.msra.mxu0 0.0
    %265 = vmatprep.subr.mxu0 0.0
    %266 = vmatpush1.msra.mxu0 0.0
    %267 = vmatprep.subr.mxu0 0.0
    %268 = vmatpush1.msra.mxu0 0.0
    %269 = vmatprep.subr.mxu0 0.0
    %270 = vmatpush1.msra.mxu0 0.0
    %271 = vmatprep.subr.mxu0 0.0
    %272 = vmatpush1.msra.mxu0 0.0
    %273 = vmatprep.subr.mxu0 0.0
    %274 = vmatpush1.msra.mxu0 0.0
    %275 = vmatprep.subr.mxu0 0.0
    %276 = vmatpush1.msra.mxu0 0.0
    %277 = vmatprep.subr.mxu0 0.0
    %278 = vmatpush1.msra.mxu0 0.0
    %279 = vmatprep.subr.mxu0 0.0
    %280 = vmatpush1.msra.mxu0 0.0
    %281 = vmatprep.subr.mxu0 0.0
    %282 = vmatpush1.msra.mxu0 0.0
    %283 = vmatprep.subr.mxu0 0.0
    %284 = vmatpush1.msra.mxu0 0.0
    %285 = vmatprep.subr.mxu0 0.0
    %286 = vmatpush1.msra.mxu0 0.0
    %287 = vmatprep.subr.mxu0 0.0
    %288 = vmatpush1.msra.mxu0 0.0
    %289 = vmatprep.subr.mxu0 0.0
    %290 = vmatpush1.msra.mxu0 0.0
    %291 = vmatprep.subr.mxu0 0.0
    %292 = vmatpush1.msra.mxu0 0.0
    %293 = vmatprep.subr.mxu0 0.0
    %294 = vmatpush1.msra.mxu0 0.0
    %295 = vmatprep.subr.mxu0 0.0
    %296 = vmatpush1.msra.mxu0 0.0
    %297 = vmatprep.subr.mxu0 0.0
    %298 = vmatpush1.msra.mxu0 0.0
    %299 = vmatprep.subr.mxu0 0.0
    %300 = vmatpush1.msra.mxu0 0.0
    %301 = vmatprep.subr.mxu0 0.0
    %302 = vmatpush1.msra.mxu0 0.0
    %303 = vmatprep.mubr.f32.mxu0 0.0
    %304 = vmatmul.mubr.f32.gmra.mrb[0].mxu0 %v237
    %v305 = vpop.f32.mrb[0].mxu0
    %v306 = vadd.f32 %v234, %v305
    %v307 = vpop.f32.mrb[0].mxu0
    %308 = vdwg.mxu0
    %v310 = vlaneseq
    %v311 = vshrl.u32 %v310, 7
    %v312 = vsub.s32 0, %v311
    %v313 = vrot.slane %v55, %v312
    %315 = vmatprep.subr.mxu0 0.0
    %316 = vmatpush1.msra.mxu0 %v39
    %317 = vmatprep.subr.mxu0 0.0
    %318 = vmatpush1.msra.mxu0 %v40
    %319 = vmatprep.subr.mxu0 0.0
    %320 = vmatpush1.msra.mxu0 %v41
    %321 = vmatprep.subr.mxu0 0.0
    %322 = vmatpush1.msra.mxu0 %v42
    %323 = vmatprep.subr.mxu0 0.0
    %324 = vmatpush1.msra.mxu0 %v43
    %325 = vmatprep.subr.mxu0 0.0
    %326 = vmatpush1.msra.mxu0 %v44
    %327 = vmatprep.subr.mxu0 0.0
    %328 = vmatpush1.msra.mxu0 %v45
    %329 = vmatprep.subr.mxu0 0.0
    %330 = vmatpush1.msra.mxu0 %v46
    %331 = vmatprep.subr.mxu0 0.0
    %332 = vmatpush1.msra.mxu0 %v47
    %333 = vmatprep.subr.mxu0 0.0
    %334 = vmatpush1.msra.mxu0 %v48
    %335 = vmatprep.subr.mxu0 0.0
    %336 = vmatpush1.msra.mxu0 %v49
    %337 = vmatprep.subr.mxu0 0.0
    %338 = vmatpush1.msra.mxu0 %v50
    %339 = vmatprep.subr.mxu0 0.0
    %340 = vmatpush1.msra.mxu0 %v51
    %341 = vmatprep.subr.mxu0 0.0
    %342 = vmatpush1.msra.mxu0 %v52
    %343 = vmatprep.subr.mxu0 0.0
    %344 = vmatpush1.msra.mxu0 %v53
    %345 = vmatprep.subr.mxu0 0.0
    %346 = vmatpush1.msra.mxu0 %v54
    %347 = vmatprep.subr.mxu0 0.0
    %348 = vmatpush1.msra.mxu0 0.0
    %349 = vmatprep.subr.mxu0 0.0
    %350 = vmatpush1.msra.mxu0 0.0
    %351 = vmatprep.subr.mxu0 0.0
    %352 = vmatpush1.msra.mxu0 0.0
    %353 = vmatprep.subr.mxu0 0.0
    %354 = vmatpush1.msra.mxu0 0.0
    %355 = vmatprep.subr.mxu0 0.0
    %356 = vmatpush1.msra.mxu0 0.0
    %357 = vmatprep.subr.mxu0 0.0
    %358 = vmatpush1.msra.mxu0 0.0
    %359 = vmatprep.subr.mxu0 0.0
    %360 = vmatpush1.msra.mxu0 0.0
    %361 = vmatprep.subr.mxu0 0.0
    %362 = vmatpush1.msra.mxu0 0.0
    %363 = vmatprep.subr.mxu0 0.0
    %364 = vmatpush1.msra.mxu0 0.0
    %365 = vmatprep.subr.mxu0 0.0
    %366 = vmatpush1.msra.mxu0 0.0
    %367 = vmatprep.subr.mxu0 0.0
    %368 = vmatpush1.msra.mxu0 0.0
    %369 = vmatprep.subr.mxu0 0.0
    %370 = vmatpush1.msra.mxu0 0.0
    %371 = vmatprep.subr.mxu0 0.0
    %372 = vmatpush1.msra.mxu0 0.0
    %373 = vmatprep.subr.mxu0 0.0
    %374 = vmatpush1.msra.mxu0 0.0
    %375 = vmatprep.subr.mxu0 0.0
    %376 = vmatpush1.msra.mxu0 0.0
    %377 = vmatprep.subr.mxu0 0.0
    %378 = vmatpush1.msra.mxu0 0.0
    %379 = vmatprep.mubr.f32.mxu0 0.0
    %380 = vmatmul.mubr.f32.gmra.mrb[0].mxu0 %v306
    %v381 = vpop.f32.mrb[0].mxu0
    %v382 = vadd.f32 %v313, %v381
    %v383 = vpop.f32.mrb[0].mxu0
    %384 = vdwg.mxu0
    %385 = vst [vmem:[#allocation2] sm:$0x3] %v382
    // Predicated region
    $region30: #{attention_module_forward.1} parent=1 // pred_check
      _
    $region31: #{attention_module_forward.1} parent=1 // pred_check_branch
      %387 = sbr.rel (0) target = $region33
    $region32: #{attention_module_forward.1} parent=1 // pred_region
      %s389 = ssub.s32 32, 32
      %390 = vsyncadd [#allocation3], %s389
      %s392 = sshll.u32 [#allocation2], 4
      %s393 = int_to_ptr.vmem [resolvable:$true] %s392
      %395 = dma.vmem_to_hbm [thread:$0]  %s393, 32, %s7, [#allocation3]
    $region33: #{attention_module_forward.1} parent=1 // pred_fallthru
      _
    // Predicated region
    $region34: #{attention_module_forward.1} parent=1 // pred_check
      _
    $region35: #{attention_module_forward.1} parent=1 // pred_check_branch
      %397 = sbr.rel (0) target = $region37
    $region36: #{attention_module_forward.1} parent=1 // pred_region
      %398 = dma.done [#allocation3], 32
    $region37: #{attention_module_forward.1} parent=1 // pred_fallthru
      _
    %399 = vsyncpa [#allocation3], 1

</llo_original>
